<compile_context>
chip_gen: v5e
topology: v5e:2x2
jax: 0.10.0
libtpu: 0.0.40
codegen_flags: <defaults>
</compile_context>

<pallas_src>
import functools
import math

import jax
import jax.numpy as jnp
from jax import lax
from jax.experimental import pallas as pl
from jax.experimental.pallas import tpu as pltpu


def _round_up(a, b):
    return (a + b - 1) // b * b


def _latent_mapping_kernel(x_ref, *refs, n_features, leakiness, eps):
    """
    x_ref : (tb, noise_pad)  activation tile (f32, lane-padded with zeros)
    refs  : w0_t, b0, w1_t, b1, ..., o_ref
            w_t : (d_in_pad, d_out_pad) bf16, He constant pre-folded
            b   : (1, d_out_pad) f32, He constant pre-folded
    o_ref : (tb, feat_pad)
    """
    o_ref = refs[-1]
    wb = refs[:-1]
    n_layers = len(wb) // 2

    x = x_ref[...].astype(jnp.float32)

    # WeirdoNorm in f32: x * rsqrt(mean(x^2) + eps), mean over the REAL feature
    # count (padded lanes hold zeros and do not perturb the sum).  rsqrt -> EUP.
    ms = jnp.sum(x * x, axis=-1, keepdims=True) * jnp.float32(1.0 / n_features)
    x = x * lax.rsqrt(ms + jnp.float32(eps))

    a = jnp.float32(leakiness)
    for l in range(n_layers):
        # bf16 operands into the MXU, f32 accumulator.
        h = jnp.dot(x.astype(jnp.bfloat16), wb[2 * l][...],
                    preferred_element_type=jnp.float32)
        h = h + wb[2 * l + 1][...]          # bias (He already folded in)
        x = jnp.maximum(h, a * h)           # leaky ReLU as a single vmax

    o_ref[...] = x.astype(o_ref.dtype)


def latent_mapping(x, weights, biases, leakiness=0.2, eps=1e-8, block_rows=256):
    """
    x       : (B, noise_size) float32
    weights : list of (d_out, d_in) arrays (PyTorch nn.Linear layout)
    biases  : list of (d_out,) arrays
    returns : (B, layer_size)
    """
    B, noise_size = x.shape
    n_layers = len(weights)
    layer_size = weights[-1].shape[0]
    out_dtype = x.dtype

    # He constant: sqrt(2 / fan_in), fan_in = d_in — folded into weights/biases.
    he = [math.sqrt(2.0 / w.shape[1]) for w in weights]

    # Lane padding of feature dims to multiples of 128.
    noise_pad = _round_up(noise_size, 128)
    feat_pad = _round_up(layer_size, 128)
    d_in_pads = [noise_pad] + [feat_pad] * (n_layers - 1)

    w_ts, b2d = [], []
    for l, (w, b) in enumerate(zip(weights, biases)):
        w_t = jnp.asarray(w, jnp.float32).T * jnp.float32(he[l])   # (d_in, d_out)
        w_t = jnp.pad(w_t, ((0, d_in_pads[l] - w_t.shape[0]),
                            (0, feat_pad - w_t.shape[1])))
        w_ts.append(w_t.astype(jnp.bfloat16))                      # bf16 -> MXU
        bb = (jnp.asarray(b, jnp.float32) * jnp.float32(he[l])).reshape(1, -1)
        bb = jnp.pad(bb, ((0, 0), (0, feat_pad - bb.shape[1])))
        b2d.append(bb)                                             # tiny, keep f32

    # Batch tiling: pad B up to a multiple of the row tile so the grid always
    # pipelines (and can shard across both v7x TensorCores when >1 step).
    tb = min(block_rows, _round_up(B, 8))
    b_pad = _round_up(B, tb)
    grid = (b_pad // tb,)
    x_pad = jnp.pad(jnp.asarray(x, jnp.float32),
                    ((0, b_pad - B), (0, noise_pad - noise_size)))

    in_specs = [pl.BlockSpec((tb, noise_pad), lambda g: (g, 0))]
    operands = [x_pad]
    for w_t, bb in zip(w_ts, b2d):
        # Constant index_map + single buffering: weights stay resident in VMEM
        # with no wasted second pipeline buffer.
        in_specs.append(pl.BlockSpec(w_t.shape, lambda g: (0, 0),
                                     pipeline_mode=pl.Buffered(1)))
        in_specs.append(pl.BlockSpec(bb.shape, lambda g: (0, 0),
                                     pipeline_mode=pl.Buffered(1)))
        operands.append(w_t)
        operands.append(bb)

    # VMEM budget: x tile (x2 buffers) + out tile (x2) + weights/biases (x1).
    est_bytes = (2 * tb * noise_pad * 4
                 + 2 * tb * feat_pad * 4
                 + sum(int(w.size) * 2 for w in w_ts)
                 + sum(int(b.size) * 4 for b in b2d))
    vmem_limit = int(min(max(32 * 2**20, 2 * est_bytes), 100 * 2**20))

    kernel = functools.partial(
        _latent_mapping_kernel,
        n_features=noise_size,
        leakiness=float(leakiness),
        eps=float(eps),
    )

    out = pl.pallas_call(
        kernel,
        out_shape=jax.ShapeDtypeStruct((b_pad, feat_pad), out_dtype),
        grid_spec=pltpu.PrefetchScalarGridSpec(
            num_scalar_prefetch=0,
            grid=grid,
            in_specs=in_specs,
            out_specs=pl.BlockSpec((tb, feat_pad), lambda g: (g, 0)),
        ),
        compiler_params=pltpu.CompilerParams(
            dimension_semantics=("parallel",),
            vmem_limit_bytes=vmem_limit),
    )(*operands)

    return out[:B, :layer_size]


def _reference(x, weights, biases, leakiness=0.2, eps=1e-8):
    """Pure-JAX f32 mirror of LatentMapping.forward."""
    h = x * lax.rsqrt(jnp.mean(x * x, axis=1, keepdims=True) + eps)
    for w, b in zip(weights, biases):
        he = math.sqrt(2.0 / w.shape[1])
        h = (h @ w.T + b) * he
        h = jnp.where(h >= 0, h, leakiness * h)
    return h


if __name__ == "__main__":
    key = jax.random.PRNGKey(0)
    B, noise_size, n_layers, layer_size = 8, 32, 4, 32

    keys = jax.random.split(key, n_layers + 1)
    x = jax.random.normal(keys[0], (B, noise_size), dtype=jnp.float32)

    weights, biases = [], []
    d_in = noise_size
    for l in range(n_layers):
        # EqualizedLayer init: weight ~ N(0, 1), bias = 0.
        w = jax.random.normal(keys[l + 1], (layer_size, d_in), dtype=jnp.float32)
        b = jnp.zeros((layer_size,), dtype=jnp.float32)
        weights.append(w)
        biases.append(b)
        d_in = layer_size

    out = latent_mapping(x, weights, biases, leakiness=0.2)
    out = jax.block_until_ready(out)

    ref = _reference(x, weights, biases, leakiness=0.2)
    assert out.shape == (B, layer_size)
    # bf16 weights/activations into the MXU -> loosen tolerance vs f32 reference.
    rel_err = float(jnp.max(jnp.abs(out - ref)) / (jnp.max(jnp.abs(ref)) + 1e-6))
    assert rel_err < 5e-2, rel_err

    print("KERNEL_OK")
</pallas_src>

<mosaic_0001>
module attributes {stable_mosaic.version = 11 : i64} {
  func.func @_latent_mapping_kernel(%arg0: i32, %arg1: memref<8x128xf32, #tpu.memory_space<vmem>>, %arg2: memref<128x128xbf16, #tpu.memory_space<vmem>>, %arg3: memref<1x128xf32, #tpu.memory_space<vmem>>, %arg4: memref<128x128xbf16, #tpu.memory_space<vmem>>, %arg5: memref<1x128xf32, #tpu.memory_space<vmem>>, %arg6: memref<128x128xbf16, #tpu.memory_space<vmem>>, %arg7: memref<1x128xf32, #tpu.memory_space<vmem>>, %arg8: memref<128x128xbf16, #tpu.memory_space<vmem>>, %arg9: memref<1x128xf32, #tpu.memory_space<vmem>>, %arg10: memref<8x128xf32, #tpu.memory_space<vmem>>) attributes {dimension_semantics = [#tpu.dimension_semantics<parallel>], iteration_bounds = array<i64: 1>, scalar_prefetch = 0 : i64, scratch_operands = 0 : i64, tpu.core_type = #tpu.core_type<tc>, window_params = [{transform_indices = @transform_0, window_bounds = array<i64: 8, 128>}, {pipeline_mode = #tpu.pipeline_mode<synchronous>, transform_indices = @transform_1, window_bounds = array<i64: 128, 128>}, {pipeline_mode = #tpu.pipeline_mode<synchronous>, transform_indices = @transform_2, window_bounds = array<i64: 1, 128>}, {pipeline_mode = #tpu.pipeline_mode<synchronous>, transform_indices = @transform_3, window_bounds = array<i64: 128, 128>}, {pipeline_mode = #tpu.pipeline_mode<synchronous>, transform_indices = @transform_4, window_bounds = array<i64: 1, 128>}, {pipeline_mode = #tpu.pipeline_mode<synchronous>, transform_indices = @transform_5, window_bounds = array<i64: 128, 128>}, {pipeline_mode = #tpu.pipeline_mode<synchronous>, transform_indices = @transform_6, window_bounds = array<i64: 1, 128>}, {pipeline_mode = #tpu.pipeline_mode<synchronous>, transform_indices = @transform_7, window_bounds = array<i64: 128, 128>}, {pipeline_mode = #tpu.pipeline_mode<synchronous>, transform_indices = @transform_8, window_bounds = array<i64: 1, 128>}, {transform_indices = @transform_9, window_bounds = array<i64: 8, 128>}]} {
    %c0 = arith.constant 0 : index
    %c0_0 = arith.constant 0 : index
    %0 = vector.load %arg1[%c0, %c0_0] : memref<8x128xf32, #tpu.memory_space<vmem>>, vector<8x128xf32>
    %1 = arith.mulf %0, %0 : vector<8x128xf32>
    %cst = arith.constant dense<0.000000e+00> : vector<8xf32>
    %2 = vector.multi_reduction <add>, %1, %cst [1] : vector<8x128xf32> to vector<8xf32>
    %3 = vector.shape_cast %2 : vector<8xf32> to vector<8x1xf32>
    %cst_1 = arith.constant 3.125000e-02 : f32
    %4 = vector.broadcast %cst_1 : f32 to vector<8x1xf32>
    %5 = arith.mulf %3, %4 : vector<8x1xf32>
    %cst_2 = arith.constant 9.99999993E-9 : f32
    %6 = vector.broadcast %cst_2 : f32 to vector<8x1xf32>
    %7 = arith.addf %5, %6 : vector<8x1xf32>
    %8 = math.rsqrt %7 : vector<8x1xf32>
    %9 = vector.broadcast %8 : vector<8x1xf32> to vector<8x128xf32>
    %10 = arith.mulf %0, %9 : vector<8x128xf32>
    %11 = arith.truncf %10 : vector<8x128xf32> to vector<8x128xbf16>
    %c0_3 = arith.constant 0 : index
    %c0_4 = arith.constant 0 : index
    %12 = vector.load %arg2[%c0_3, %c0_4] : memref<128x128xbf16, #tpu.memory_space<vmem>>, vector<128x128xbf16>
    %cst_5 = arith.constant dense<0.000000e+00> : vector<8x128xf32>
    %13 = tpu.matmul %11, %12, %cst_5 {dimension_numbers = #tpu.dot_dimension_numbers<[1], [0], [0], [1], [0, 0, 1, 1], [], []>} : vector<8x128xbf16>, vector<128x128xbf16>, vector<8x128xf32> -> vector<8x128xf32>
    %c0_6 = arith.constant 0 : index
    %c0_7 = arith.constant 0 : index
    %14 = vector.load %arg3[%c0_6, %c0_7] : memref<1x128xf32, #tpu.memory_space<vmem>>, vector<1x128xf32>
    %15 = vector.broadcast %14 : vector<1x128xf32> to vector<8x128xf32>
    %16 = arith.addf %13, %15 : vector<8x128xf32>
    %cst_8 = arith.constant 2.000000e-01 : f32
    %17 = vector.broadcast %cst_8 : f32 to vector<8x128xf32>
    %18 = arith.mulf %17, %16 : vector<8x128xf32>
    %19 = arith.maximumf %16, %18 : vector<8x128xf32>
    %20 = arith.truncf %19 : vector<8x128xf32> to vector<8x128xbf16>
    %c0_9 = arith.constant 0 : index
    %c0_10 = arith.constant 0 : index
    %21 = vector.load %arg4[%c0_9, %c0_10] : memref<128x128xbf16, #tpu.memory_space<vmem>>, vector<128x128xbf16>
    %cst_11 = arith.constant dense<0.000000e+00> : vector<8x128xf32>
    %22 = tpu.matmul %20, %21, %cst_11 {dimension_numbers = #tpu.dot_dimension_numbers<[1], [0], [0], [1], [0, 0, 1, 1], [], []>} : vector<8x128xbf16>, vector<128x128xbf16>, vector<8x128xf32> -> vector<8x128xf32>
    %c0_12 = arith.constant 0 : index
    %c0_13 = arith.constant 0 : index
    %23 = vector.load %arg5[%c0_12, %c0_13] : memref<1x128xf32, #tpu.memory_space<vmem>>, vector<1x128xf32>
    %24 = vector.broadcast %23 : vector<1x128xf32> to vector<8x128xf32>
    %25 = arith.addf %22, %24 : vector<8x128xf32>
    %cst_14 = arith.constant 2.000000e-01 : f32
    %26 = vector.broadcast %cst_14 : f32 to vector<8x128xf32>
    %27 = arith.mulf %26, %25 : vector<8x128xf32>
    %28 = arith.maximumf %25, %27 : vector<8x128xf32>
    %29 = arith.truncf %28 : vector<8x128xf32> to vector<8x128xbf16>
    %c0_15 = arith.constant 0 : index
    %c0_16 = arith.constant 0 : index
    %30 = vector.load %arg6[%c0_15, %c0_16] : memref<128x128xbf16, #tpu.memory_space<vmem>>, vector<128x128xbf16>
    %cst_17 = arith.constant dense<0.000000e+00> : vector<8x128xf32>
    %31 = tpu.matmul %29, %30, %cst_17 {dimension_numbers = #tpu.dot_dimension_numbers<[1], [0], [0], [1], [0, 0, 1, 1], [], []>} : vector<8x128xbf16>, vector<128x128xbf16>, vector<8x128xf32> -> vector<8x128xf32>
    %c0_18 = arith.constant 0 : index
    %c0_19 = arith.constant 0 : index
    %32 = vector.load %arg7[%c0_18, %c0_19] : memref<1x128xf32, #tpu.memory_space<vmem>>, vector<1x128xf32>
    %33 = vector.broadcast %32 : vector<1x128xf32> to vector<8x128xf32>
    %34 = arith.addf %31, %33 : vector<8x128xf32>
    %cst_20 = arith.constant 2.000000e-01 : f32
    %35 = vector.broadcast %cst_20 : f32 to vector<8x128xf32>
    %36 = arith.mulf %35, %34 : vector<8x128xf32>
    %37 = arith.maximumf %34, %36 : vector<8x128xf32>
    %38 = arith.truncf %37 : vector<8x128xf32> to vector<8x128xbf16>
    %c0_21 = arith.constant 0 : index
    %c0_22 = arith.constant 0 : index
    %39 = vector.load %arg8[%c0_21, %c0_22] : memref<128x128xbf16, #tpu.memory_space<vmem>>, vector<128x128xbf16>
    %cst_23 = arith.constant dense<0.000000e+00> : vector<8x128xf32>
    %40 = tpu.matmul %38, %39, %cst_23 {dimension_numbers = #tpu.dot_dimension_numbers<[1], [0], [0], [1], [0, 0, 1, 1], [], []>} : vector<8x128xbf16>, vector<128x128xbf16>, vector<8x128xf32> -> vector<8x128xf32>
    %c0_24 = arith.constant 0 : index
    %c0_25 = arith.constant 0 : index
    %41 = vector.load %arg9[%c0_24, %c0_25] : memref<1x128xf32, #tpu.memory_space<vmem>>, vector<1x128xf32>
    %42 = vector.broadcast %41 : vector<1x128xf32> to vector<8x128xf32>
    %43 = arith.addf %40, %42 : vector<8x128xf32>
    %cst_26 = arith.constant 2.000000e-01 : f32
    %44 = vector.broadcast %cst_26 : f32 to vector<8x128xf32>
    %45 = arith.mulf %44, %43 : vector<8x128xf32>
    %46 = arith.maximumf %43, %45 : vector<8x128xf32>
    %c0_27 = arith.constant 0 : index
    %c0_28 = arith.constant 0 : index
    %47 = vector.load %arg10[%c0_27, %c0_28] : memref<8x128xf32, #tpu.memory_space<vmem>>, vector<8x128xf32>
    tpu.vector_store %arg10[%c0_27, %c0_28], %46 {strides = array<i32>} : memref<8x128xf32, #tpu.memory_space<vmem>>, vector<8x128xf32>,
    return
  }
  func.func @transform_0(%arg0: i32) -> (i32, i32) {
    %c0_i32 = arith.constant 0 : i32
    %c0_i32_0 = arith.constant 0 : i32
    return %arg0, %c0_i32 : i32, i32
  }
  func.func @transform_1(%arg0: i32) -> (i32, i32) {
    %c0_i32 = arith.constant 0 : i32
    %c0_i32_0 = arith.constant 0 : i32
    %c0_i32_1 = arith.constant 0 : i32
    return %c0_i32, %c0_i32_0 : i32, i32
  }
  func.func @transform_2(%arg0: i32) -> (i32, i32) {
    %c0_i32 = arith.constant 0 : i32
    %c0_i32_0 = arith.constant 0 : i32
    %c0_i32_1 = arith.constant 0 : i32
    return %c0_i32, %c0_i32_0 : i32, i32
  }
  func.func @transform_3(%arg0: i32) -> (i32, i32) {
    %c0_i32 = arith.constant 0 : i32
    %c0_i32_0 = arith.constant 0 : i32
    %c0_i32_1 = arith.constant 0 : i32
    return %c0_i32, %c0_i32_0 : i32, i32
  }
  func.func @transform_4(%arg0: i32) -> (i32, i32) {
    %c0_i32 = arith.constant 0 : i32
    %c0_i32_0 = arith.constant 0 : i32
    %c0_i32_1 = arith.constant 0 : i32
    return %c0_i32, %c0_i32_0 : i32, i32
  }
  func.func @transform_5(%arg0: i32) -> (i32, i32) {
    %c0_i32 = arith.constant 0 : i32
    %c0_i32_0 = arith.constant 0 : i32
    %c0_i32_1 = arith.constant 0 : i32
    return %c0_i32, %c0_i32_0 : i32, i32
  }
  func.func @transform_6(%arg0: i32) -> (i32, i32) {
    %c0_i32 = arith.constant 0 : i32
    %c0_i32_0 = arith.constant 0 : i32
    %c0_i32_1 = arith.constant 0 : i32
    return %c0_i32, %c0_i32_0 : i32, i32
  }
  func.func @transform_7(%arg0: i32) -> (i32, i32) {
    %c0_i32 = arith.constant 0 : i32
    %c0_i32_0 = arith.constant 0 : i32
    %c0_i32_1 = arith.constant 0 : i32
    return %c0_i32, %c0_i32_0 : i32, i32
  }
  func.func @transform_8(%arg0: i32) -> (i32, i32) {
    %c0_i32 = arith.constant 0 : i32
    %c0_i32_0 = arith.constant 0 : i32
    %c0_i32_1 = arith.constant 0 : i32
    return %c0_i32, %c0_i32_0 : i32, i32
  }
  func.func @transform_9(%arg0: i32) -> (i32, i32) {
    %c0_i32 = arith.constant 0 : i32
    %c0_i32_0 = arith.constant 0 : i32
    return %arg0, %c0_i32 : i32, i32
  }
}

</mosaic_0001>

<llo_original>
// kernel: tpu_custom_call.1
$region0: #{tpu_custom_call.1}
  #allocation0 [shape = 'u32[]', space=smem, size = 0x4, offset = 0x4, fixed_abs, tag = 'smem constant byte address 0x4 - core index']
  #allocation1 [shape = 'u32[72,128]{1,0:T(1,128)}', space=vmem, size = 0x9000, scoped, tag = 'internal scratch']
  %s0 = inlined_call_operand.hbm [shape: f32[8,128], index: 0, kind: input, shape index: {}]
  %s1 = inlined_call_operand.hbm [shape: bf16[128,128], index: 1, kind: input, shape index: {}]
  %s2 = inlined_call_operand.vmem [shape: f32[1,128], index: 2, kind: input, shape index: {}]
  %s3 = inlined_call_operand.hbm [shape: bf16[128,128], index: 3, kind: input, shape index: {}]
  %s4 = inlined_call_operand.vmem [shape: f32[1,128], index: 4, kind: input, shape index: {}]
  %s5 = inlined_call_operand.hbm [shape: bf16[128,128], index: 5, kind: input, shape index: {}]
  %s6 = inlined_call_operand.vmem [shape: f32[1,128], index: 6, kind: input, shape index: {}]
  %s7 = inlined_call_operand.hbm [shape: bf16[128,128], index: 7, kind: input, shape index: {}]
  %s8 = inlined_call_operand.vmem [shape: f32[1,128], index: 8, kind: input, shape index: {}]
  %s9 = inlined_call_operand.hbm [shape: f32[8,128], index: 9, kind: output, shape index: {}]
  %s10 = sld [smem:[#allocation0]]
  $region66: #{tpu_custom_call.1} parent=0
    _
  %s12 = ssub.s32 1, %s10
  %s13 = scalar_select 0, %s12, %s10
  $region1: #{tpu_custom_call.1} parent=0
    #allocation2 [shape = 'u8[4096]{0}', space=vmem, size = 0x1000, scoped, tag = 'input window, operand 0, single buffered']
    #allocation3 [shape = 's32[1]{0}', space=sflag, size = 0x4, scoped, tag = 'scoped memory for tpu_custom_call.1']
    #allocation4 [shape = 's32[1]{0}', space=sflag, size = 0x4, scoped, tag = 'scoped memory for tpu_custom_call.1']
    #allocation5 [shape = 'u8[32768]{0}', space=vmem, size = 0x8000, scoped, tag = 'input window, operand 1, single buffered']
    #allocation6 [shape = 's32[1]{0}', space=sflag, size = 0x4, scoped, tag = 'scoped memory for tpu_custom_call.1']
    #allocation7 [shape = 'u8[32768]{0}', space=vmem, size = 0x8000, scoped, tag = 'input window, operand 3, single buffered']
    #allocation8 [shape = 'u8[32768]{0}', space=vmem, size = 0x8000, scoped, tag = 'input window, operand 5, single buffered']
    #allocation9 [shape = 's32[1]{0}', space=sflag, size = 0x4, scoped, tag = 'scoped memory for tpu_custom_call.1']
    #allocation10 [shape = 'u8[32768]{0}', space=vmem, size = 0x8000, scoped, tag = 'input window, operand 7, single buffered']
    #allocation11 [shape = 'u8[4096]{0}', space=vmem, size = 0x1000, scoped, tag = 'output window, operand 0, single buffered']
    %14 = vsyncpa [#allocation3], 0
    %15 = vsyncpa [#allocation6], 0
    %16 = vsyncpa [#allocation9], 0
    %17 = vsyncpa [#allocation4], 0
    // Predicated region
    $region2: #{tpu_custom_call.1} parent=1 // pred_check
      _
    $region3: #{tpu_custom_call.1} parent=1 // pred_check_branch
      %19 = sbr.rel (0) target = $region5
    $region4: #{tpu_custom_call.1} parent=1 // pred_region
      %21 = vsyncadd [#allocation3], 0
      %s23 = sshll.u32 %s0, 4
      %s24 = int_to_ptr.hbm [resolvable:$true] %s23
      %s25 = sshll.u32 [#allocation2], 4
      %s26 = int_to_ptr.vmem [resolvable:$true] %s25
      %28 = dma.hbm_to_vmem [thread:$0]  %s24, 128, %s26, [#allocation3]
    $region5: #{tpu_custom_call.1} parent=1 // pred_fallthru
      _
    // Predicated region
    $region6: #{tpu_custom_call.1} parent=1 // pred_check
      _
    $region7: #{tpu_custom_call.1} parent=1 // pred_check_branch
      %30 = sbr.rel (0) target = $region9
    $region8: #{tpu_custom_call.1} parent=1 // pred_region
      %32 = vsyncadd [#allocation6], 0
      %s33 = sshll.u32 %s1, 4
      %s34 = int_to_ptr.hbm [resolvable:$true] %s33
      %s35 = sshll.u32 [#allocation5], 4
      %s36 = int_to_ptr.vmem [resolvable:$true] %s35
      %41 = dma.hbm_to_vmem [thread:$0]  %s34, 1024, %s36, [#allocation6], 64, 64, 4
    $region9: #{tpu_custom_call.1} parent=1 // pred_fallthru
      _
    // Predicated region
    $region10: #{tpu_custom_call.1} parent=1 // pred_check
      _
    $region11: #{tpu_custom_call.1} parent=1 // pred_check_branch
      %43 = sbr.rel (0) target = $region13
    $region12: #{tpu_custom_call.1} parent=1 // pred_region
      _
    $region13: #{tpu_custom_call.1} parent=1 // pred_fallthru
      _
    // Predicated region
    $region14: #{tpu_custom_call.1} parent=1 // pred_check
      _
    $region15: #{tpu_custom_call.1} parent=1 // pred_check_branch
      %45 = sbr.rel (0) target = $region17
    $region16: #{tpu_custom_call.1} parent=1 // pred_region
      %47 = vsyncadd [#allocation6], 0
      %s48 = sshll.u32 %s3, 4
      %s49 = int_to_ptr.hbm [resolvable:$true] %s48
      %s50 = sshll.u32 [#allocation7], 4
      %s51 = int_to_ptr.vmem [resolvable:$true] %s50
      %56 = dma.hbm_to_vmem [thread:$0]  %s49, 1024, %s51, [#allocation6], 64, 64, 4
    $region17: #{tpu_custom_call.1} parent=1 // pred_fallthru
      _
    // Predicated region
    $region18: #{tpu_custom_call.1} parent=1 // pred_check
      _
    $region19: #{tpu_custom_call.1} parent=1 // pred_check_branch
      %58 = sbr.rel (0) target = $region21
    $region20: #{tpu_custom_call.1} parent=1 // pred_region
      _
    $region21: #{tpu_custom_call.1} parent=1 // pred_fallthru
      _
    // Predicated region
    $region22: #{tpu_custom_call.1} parent=1 // pred_check
      _
    $region23: #{tpu_custom_call.1} parent=1 // pred_check_branch
      %60 = sbr.rel (0) target = $region25
    $region24: #{tpu_custom_call.1} parent=1 // pred_region
      %62 = vsyncadd [#allocation9], 0
      %s63 = sshll.u32 %s5, 4
      %s64 = int_to_ptr.hbm [resolvable:$true] %s63
      %s65 = sshll.u32 [#allocation8], 4
      %s66 = int_to_ptr.vmem [resolvable:$true] %s65
      %71 = dma.hbm_to_vmem [thread:$0]  %s64, 1024, %s66, [#allocation9], 64, 64, 4
    $region25: #{tpu_custom_call.1} parent=1 // pred_fallthru
      _
    // Predicated region
    $region26: #{tpu_custom_call.1} parent=1 // pred_check
      _
    $region27: #{tpu_custom_call.1} parent=1 // pred_check_branch
      %73 = sbr.rel (0) target = $region29
    $region28: #{tpu_custom_call.1} parent=1 // pred_region
      _
    $region29: #{tpu_custom_call.1} parent=1 // pred_fallthru
      _
    // Predicated region
    $region30: #{tpu_custom_call.1} parent=1 // pred_check
      _
    $region31: #{tpu_custom_call.1} parent=1 // pred_check_branch
      %75 = sbr.rel (0) target = $region33
    $region32: #{tpu_custom_call.1} parent=1 // pred_region
      %77 = vsyncadd [#allocation9], 0
      %s78 = sshll.u32 %s7, 4
      %s79 = int_to_ptr.hbm [resolvable:$true] %s78
      %s80 = sshll.u32 [#allocation10], 4
      %s81 = int_to_ptr.vmem [resolvable:$true] %s80
      %86 = dma.hbm_to_vmem [thread:$0]  %s79, 1024, %s81, [#allocation9], 64, 64, 4
    $region33: #{tpu_custom_call.1} parent=1 // pred_fallthru
      _
    // Predicated region
    $region34: #{tpu_custom_call.1} parent=1 // pred_check
      _
    $region35: #{tpu_custom_call.1} parent=1 // pred_check_branch
      %88 = sbr.rel (0) target = $region37
    $region36: #{tpu_custom_call.1} parent=1 // pred_region
      _
    $region37: #{tpu_custom_call.1} parent=1 // pred_fallthru
      _
    // Predicated region
    $region38: #{tpu_custom_call.1} parent=1 // pred_check
      _
    $region39: #{tpu_custom_call.1} parent=1 // pred_check_branch
      %90 = sbr.rel (0) target = $region41
    $region40: #{tpu_custom_call.1} parent=1 // pred_region
      %92 = dma.done [#allocation3], 128
    $region41: #{tpu_custom_call.1} parent=1 // pred_fallthru
      _
    // Predicated region
    $region42: #{tpu_custom_call.1} parent=1 // pred_check
      _
    $region43: #{tpu_custom_call.1} parent=1 // pred_check_branch
      %94 = sbr.rel (0) target = $region45
    $region44: #{tpu_custom_call.1} parent=1 // pred_region
      %96 = dma.done [#allocation6], 1024
    $region45: #{tpu_custom_call.1} parent=1 // pred_fallthru
      _
    // Predicated region
    $region46: #{tpu_custom_call.1} parent=1 // pred_check
      _
    $region47: #{tpu_custom_call.1} parent=1 // pred_check_branch
      %98 = sbr.rel (0) target = $region49
    $region48: #{tpu_custom_call.1} parent=1 // pred_region
      %100 = dma.done [#allocation6], 1024
    $region49: #{tpu_custom_call.1} parent=1 // pred_fallthru
      _
    // Predicated region
    $region50: #{tpu_custom_call.1} parent=1 // pred_check
      _
    $region51: #{tpu_custom_call.1} parent=1 // pred_check_branch
      %102 = sbr.rel (0) target = $region53
    $region52: #{tpu_custom_call.1} parent=1 // pred_region
      %104 = dma.done [#allocation9], 1024
    $region53: #{tpu_custom_call.1} parent=1 // pred_fallthru
      _
    // Predicated region
    $region54: #{tpu_custom_call.1} parent=1 // pred_check
      _
    $region55: #{tpu_custom_call.1} parent=1 // pred_check_branch
      %106 = sbr.rel (0) target = $region57
    $region56: #{tpu_custom_call.1} parent=1 // pred_region
      %108 = dma.done [#allocation9], 1024
    $region57: #{tpu_custom_call.1} parent=1 // pred_fallthru
      _
    %v109 = vld [vmem:[#allocation2] sm:$0xff]
    %v110 = vmul.f32 %v109, %v109
    %111 = vadd.xlane.f32.xlu0 %v110
    %v112 = vpop.xlane.xlu0 %111
    %v113 = vmul.f32 %v112, 0.03125
    %v114 = vadd.f32 %v113, 1e-08
    %v115 = vrsqrt.pop %v114
    %v116 = vmul.f32 %v115, %v114
    %v117 = vmul.f32 %v116, %v115
    %v118 = vmul.f32 0.5, %v117
    %v119 = vsub.f32 1.5, %v118
    %v120 = vmul.f32 %v115, %v119
    %vm121 = vweird.f32 %v114
    %vm122 = vweird.f32 %v115
    %vm123 = vmor %vm121, %vm122
    %v124 = vsel %vm123, %v115, %v120
    %v125 = vmul.f32 %v109, %v124
    %v126 = vpack.c.bf16 %v125, %v125
    %v127 = vld [vmem:[#allocation5] sm:$0xf]
    %v128 = vld [vmem:[#allocation5 + $0x4] sm:$0xf]
    %v129 = vld [vmem:[#allocation5 + $0x8] sm:$0xf]
    %v130 = vld [vmem:[#allocation5 + $0xc] sm:$0xf]
    %v131 = vld [vmem:[#allocation5 + $0x10] sm:$0xf]
    %v132 = vld [vmem:[#allocation5 + $0x14] sm:$0xf]
    %v133 = vld [vmem:[#allocation5 + $0x18] sm:$0xf]
    %v134 = vld [vmem:[#allocation5 + $0x1c] sm:$0xf]
    %v135 = vld [vmem:[#allocation5 + $0x20] sm:$0xf]
    %v136 = vld [vmem:[#allocation5 + $0x24] sm:$0xf]
    %v137 = vld [vmem:[#allocation5 + $0x28] sm:$0xf]
    %v138 = vld [vmem:[#allocation5 + $0x2c] sm:$0xf]
    %v139 = vld [vmem:[#allocation5 + $0x30] sm:$0xf]
    %v140 = vld [vmem:[#allocation5 + $0x34] sm:$0xf]
    %v141 = vld [vmem:[#allocation5 + $0x38] sm:$0xf]
    %v142 = vld [vmem:[#allocation5 + $0x3c] sm:$0xf]
    %v143 = vld [vmem:[%s2] sm:$0x1]
    %v145 = vperm.slane %v143, 0
    %v163 = vunpack.c.l.b16 %v127
    %v164 = vunpack.c.l.b16 %v128
    %v165 = vunpack.c.l.b16 %v129
    %v166 = vunpack.c.l.b16 %v130
    %v167 = vunpack.c.l.b16 %v131
    %v168 = vunpack.c.l.b16 %v132
    %v169 = vunpack.c.l.b16 %v133
    %v170 = vunpack.c.l.b16 %v134
    %v171 = vunpack.c.l.b16 %v135
    %v172 = vunpack.c.l.b16 %v136
    %v173 = vunpack.c.l.b16 %v137
    %v174 = vunpack.c.l.b16 %v138
    %v175 = vunpack.c.l.b16 %v139
    %v176 = vunpack.c.l.b16 %v140
    %v177 = vunpack.c.l.b16 %v141
    %v178 = vunpack.c.l.b16 %v142
    %v179 = vpack.c.b16 %v164, %v163
    %v180 = vpack.c.b16 %v166, %v165
    %v181 = vpack.c.b16 %v168, %v167
    %v182 = vpack.c.b16 %v170, %v169
    %v183 = vpack.c.b16 %v172, %v171
    %v184 = vpack.c.b16 %v174, %v173
    %v185 = vpack.c.b16 %v176, %v175
    %v186 = vpack.c.b16 %v178, %v177
    %195 = vmatpush.bf16.msra.mxu0 %v186
    %196 = vmatpush.bf16.msra.mxu0 %v185
    %197 = vmatpush.bf16.msra.mxu0 %v184
    %198 = vmatpush.bf16.msra.mxu0 %v183
    %199 = vmatpush.bf16.msra.mxu0 %v182
    %200 = vmatpush.bf16.msra.mxu0 %v181
    %201 = vmatpush.bf16.msra.mxu0 %v180
    %202 = vmatpush.bf16.msra.mxu0 %v179
    %203 = vmatmul.bf16.gmra.mxu0 %v126
    %v204 = vpop.f32.mrf.mxu0
    %v205 = vadd.f32 %v145, %v204
    %v206 = vpop.f32.mrf.mxu0
    %207 = vdwg.mxu0
    %v208 = vmul.f32 %v205, 0.2
    %v209 = vmax.f32 %v205, %v208
    %v210 = vpack.c.bf16 %v209, %v209
    %v211 = vld [vmem:[#allocation7] sm:$0xf]
    %v212 = vld [vmem:[#allocation7 + $0x4] sm:$0xf]
    %v213 = vld [vmem:[#allocation7 + $0x8] sm:$0xf]
    %v214 = vld [vmem:[#allocation7 + $0xc] sm:$0xf]
    %v215 = vld [vmem:[#allocation7 + $0x10] sm:$0xf]
    %v216 = vld [vmem:[#allocation7 + $0x14] sm:$0xf]
    %v217 = vld [vmem:[#allocation7 + $0x18] sm:$0xf]
    %v218 = vld [vmem:[#allocation7 + $0x1c] sm:$0xf]
    %v219 = vld [vmem:[#allocation7 + $0x20] sm:$0xf]
    %v220 = vld [vmem:[#allocation7 + $0x24] sm:$0xf]
    %v221 = vld [vmem:[#allocation7 + $0x28] sm:$0xf]
    %v222 = vld [vmem:[#allocation7 + $0x2c] sm:$0xf]
    %v223 = vld [vmem:[#allocation7 + $0x30] sm:$0xf]
    %v224 = vld [vmem:[#allocation7 + $0x34] sm:$0xf]
    %v225 = vld [vmem:[#allocation7 + $0x38] sm:$0xf]
    %v226 = vld [vmem:[#allocation7 + $0x3c] sm:$0xf]
    %v227 = vld [vmem:[%s4] sm:$0x1]
    %v229 = vperm.slane %v227, 0
    %v247 = vunpack.c.l.b16 %v211
    %v248 = vunpack.c.l.b16 %v212
    %v249 = vunpack.c.l.b16 %v213
    %v250 = vunpack.c.l.b16 %v214
    %v251 = vunpack.c.l.b16 %v215
    %v252 = vunpack.c.l.b16 %v216
    %v253 = vunpack.c.l.b16 %v217
    %v254 = vunpack.c.l.b16 %v218
    %v255 = vunpack.c.l.b16 %v219
    %v256 = vunpack.c.l.b16 %v220
    %v257 = vunpack.c.l.b16 %v221
    %v258 = vunpack.c.l.b16 %v222
    %v259 = vunpack.c.l.b16 %v223
    %v260 = vunpack.c.l.b16 %v224
    %v261 = vunpack.c.l.b16 %v225
    %v262 = vunpack.c.l.b16 %v226
    %v263 = vpack.c.b16 %v248, %v247
    %v264 = vpack.c.b16 %v250, %v249
    %v265 = vpack.c.b16 %v252, %v251
    %v266 = vpack.c.b16 %v254, %v253
    %v267 = vpack.c.b16 %v256, %v255
    %v268 = vpack.c.b16 %v258, %v257
    %v269 = vpack.c.b16 %v260, %v259
    %v270 = vpack.c.b16 %v262, %v261
    %279 = vmatpush.bf16.msra.mxu0 %v270
    %280 = vmatpush.bf16.msra.mxu0 %v269
    %281 = vmatpush.bf16.msra.mxu0 %v268
    %282 = vmatpush.bf16.msra.mxu0 %v267
    %283 = vmatpush.bf16.msra.mxu0 %v266
    %284 = vmatpush.bf16.msra.mxu0 %v265
    %285 = vmatpush.bf16.msra.mxu0 %v264
    %286 = vmatpush.bf16.msra.mxu0 %v263
    %287 = vmatmul.bf16.gmra.mxu0 %v210
    %v288 = vpop.f32.mrf.mxu0
    %v289 = vadd.f32 %v229, %v288
    %v290 = vpop.f32.mrf.mxu0
    %291 = vdwg.mxu0
    %v292 = vmul.f32 %v289, 0.2
    %v293 = vmax.f32 %v289, %v292
    %v294 = vpack.c.bf16 %v293, %v293
    %v295 = vld [vmem:[#allocation8] sm:$0xf]
    %v296 = vld [vmem:[#allocation8 + $0x4] sm:$0xf]
    %v297 = vld [vmem:[#allocation8 + $0x8] sm:$0xf]
    %v298 = vld [vmem:[#allocation8 + $0xc] sm:$0xf]
    %v299 = vld [vmem:[#allocation8 + $0x10] sm:$0xf]
    %v300 = vld [vmem:[#allocation8 + $0x14] sm:$0xf]
    %v301 = vld [vmem:[#allocation8 + $0x18] sm:$0xf]
    %v302 = vld [vmem:[#allocation8 + $0x1c] sm:$0xf]
    %v303 = vld [vmem:[#allocation8 + $0x20] sm:$0xf]
    %v304 = vld [vmem:[#allocation8 + $0x24] sm:$0xf]
    %v305 = vld [vmem:[#allocation8 + $0x28] sm:$0xf]
    %v306 = vld [vmem:[#allocation8 + $0x2c] sm:$0xf]
    %v307 = vld [vmem:[#allocation8 + $0x30] sm:$0xf]
    %v308 = vld [vmem:[#allocation8 + $0x34] sm:$0xf]
    %v309 = vld [vmem:[#allocation8 + $0x38] sm:$0xf]
    %v310 = vld [vmem:[#allocation8 + $0x3c] sm:$0xf]
    %v311 = vld [vmem:[%s6] sm:$0x1]
    %v313 = vperm.slane %v311, 0
    %v331 = vunpack.c.l.b16 %v295
    %v332 = vunpack.c.l.b16 %v296
    %v333 = vunpack.c.l.b16 %v297
    %v334 = vunpack.c.l.b16 %v298
    %v335 = vunpack.c.l.b16 %v299
    %v336 = vunpack.c.l.b16 %v300
    %v337 = vunpack.c.l.b16 %v301
    %v338 = vunpack.c.l.b16 %v302
    %v339 = vunpack.c.l.b16 %v303
    %v340 = vunpack.c.l.b16 %v304
    %v341 = vunpack.c.l.b16 %v305
    %v342 = vunpack.c.l.b16 %v306
    %v343 = vunpack.c.l.b16 %v307
    %v344 = vunpack.c.l.b16 %v308
    %v345 = vunpack.c.l.b16 %v309
    %v346 = vunpack.c.l.b16 %v310
    %v347 = vpack.c.b16 %v332, %v331
    %v348 = vpack.c.b16 %v334, %v333
    %v349 = vpack.c.b16 %v336, %v335
    %v350 = vpack.c.b16 %v338, %v337
    %v351 = vpack.c.b16 %v340, %v339
    %v352 = vpack.c.b16 %v342, %v341
    %v353 = vpack.c.b16 %v344, %v343
    %v354 = vpack.c.b16 %v346, %v345
    %363 = vmatpush.bf16.msra.mxu0 %v354
    %364 = vmatpush.bf16.msra.mxu0 %v353
    %365 = vmatpush.bf16.msra.mxu0 %v352
    %366 = vmatpush.bf16.msra.mxu0 %v351
    %367 = vmatpush.bf16.msra.mxu0 %v350
    %368 = vmatpush.bf16.msra.mxu0 %v349
    %369 = vmatpush.bf16.msra.mxu0 %v348
    %370 = vmatpush.bf16.msra.mxu0 %v347
    %371 = vmatmul.bf16.gmra.mxu0 %v294
    %v372 = vpop.f32.mrf.mxu0
    %v373 = vadd.f32 %v313, %v372
    %v374 = vpop.f32.mrf.mxu0
    %375 = vdwg.mxu0
    %v376 = vmul.f32 %v373, 0.2
    %v377 = vmax.f32 %v373, %v376
    %v378 = vpack.c.bf16 %v377, %v377
    %v379 = vld [vmem:[#allocation10] sm:$0xf]
    %v380 = vld [vmem:[#allocation10 + $0x4] sm:$0xf]
    %v381 = vld [vmem:[#allocation10 + $0x8] sm:$0xf]
    %v382 = vld [vmem:[#allocation10 + $0xc] sm:$0xf]
    %v383 = vld [vmem:[#allocation10 + $0x10] sm:$0xf]
    %v384 = vld [vmem:[#allocation10 + $0x14] sm:$0xf]
    %v385 = vld [vmem:[#allocation10 + $0x18] sm:$0xf]
    %v386 = vld [vmem:[#allocation10 + $0x1c] sm:$0xf]
    %v387 = vld [vmem:[#allocation10 + $0x20] sm:$0xf]
    %v388 = vld [vmem:[#allocation10 + $0x24] sm:$0xf]
    %v389 = vld [vmem:[#allocation10 + $0x28] sm:$0xf]
    %v390 = vld [vmem:[#allocation10 + $0x2c] sm:$0xf]
    %v391 = vld [vmem:[#allocation10 + $0x30] sm:$0xf]
    %v392 = vld [vmem:[#allocation10 + $0x34] sm:$0xf]
    %v393 = vld [vmem:[#allocation10 + $0x38] sm:$0xf]
    %v394 = vld [vmem:[#allocation10 + $0x3c] sm:$0xf]
    %v395 = vld [vmem:[%s8] sm:$0x1]
    %v397 = vperm.slane %v395, 0
    %v415 = vunpack.c.l.b16 %v379
    %v416 = vunpack.c.l.b16 %v380
    %v417 = vunpack.c.l.b16 %v381
    %v418 = vunpack.c.l.b16 %v382
    %v419 = vunpack.c.l.b16 %v383
    %v420 = vunpack.c.l.b16 %v384
    %v421 = vunpack.c.l.b16 %v385
    %v422 = vunpack.c.l.b16 %v386
    %v423 = vunpack.c.l.b16 %v387
    %v424 = vunpack.c.l.b16 %v388
    %v425 = vunpack.c.l.b16 %v389
    %v426 = vunpack.c.l.b16 %v390
    %v427 = vunpack.c.l.b16 %v391
    %v428 = vunpack.c.l.b16 %v392
    %v429 = vunpack.c.l.b16 %v393
    %v430 = vunpack.c.l.b16 %v394
    %v431 = vpack.c.b16 %v416, %v415
    %v432 = vpack.c.b16 %v418, %v417
    %v433 = vpack.c.b16 %v420, %v419
    %v434 = vpack.c.b16 %v422, %v421
    %v435 = vpack.c.b16 %v424, %v423
    %v436 = vpack.c.b16 %v426, %v425
    %v437 = vpack.c.b16 %v428, %v427
    %v438 = vpack.c.b16 %v430, %v429
    %447 = vmatpush.bf16.msra.mxu0 %v438
    %448 = vmatpush.bf16.msra.mxu0 %v437
    %449 = vmatpush.bf16.msra.mxu0 %v436
    %450 = vmatpush.bf16.msra.mxu0 %v435
    %451 = vmatpush.bf16.msra.mxu0 %v434
    %452 = vmatpush.bf16.msra.mxu0 %v433
    %453 = vmatpush.bf16.msra.mxu0 %v432
    %454 = vmatpush.bf16.msra.mxu0 %v431
    %455 = vmatmul.bf16.gmra.mxu0 %v378
    %v456 = vpop.f32.mrf.mxu0
    %v457 = vadd.f32 %v397, %v456
    %v458 = vpop.f32.mrf.mxu0
    %459 = vdwg.mxu0
    %v460 = vmul.f32 %v457, 0.2
    %v461 = vmax.f32 %v457, %v460
    %462 = vst [vmem:[#allocation11] sm:$0xff] %v461
    // Predicated region
    $region58: #{tpu_custom_call.1} parent=1 // pred_check
      _
    $region59: #{tpu_custom_call.1} parent=1 // pred_check_branch
      %464 = sbr.rel (0) target = $region61
    $region60: #{tpu_custom_call.1} parent=1 // pred_region
      %466 = vsyncadd [#allocation4], 0
      %s468 = sshll.u32 [#allocation11], 4
      %s469 = int_to_ptr.vmem [resolvable:$true] %s468
      %s470 = sshll.u32 %s9, 4
      %s471 = int_to_ptr.hbm [resolvable:$true] %s470
      %473 = dma.vmem_to_hbm [thread:$0]  %s469, 128, %s471, [#allocation4]
    $region61: #{tpu_custom_call.1} parent=1 // pred_fallthru
      _
    // Predicated region
    $region62: #{tpu_custom_call.1} parent=1 // pred_check
      _
    $region63: #{tpu_custom_call.1} parent=1 // pred_check_branch
      %475 = sbr.rel (0) target = $region65
    $region64: #{tpu_custom_call.1} parent=1 // pred_region
      %477 = dma.done [#allocation4], 128
    $region65: #{tpu_custom_call.1} parent=1 // pred_fallthru
      _
    %478 = vsyncpa [#allocation3], 1
    %479 = vsyncpa [#allocation6], 1
    %480 = vsyncpa [#allocation9], 1
    %481 = vsyncpa [#allocation4], 1

</llo_original>
